<compile_context>
chip_gen: v7x
topology: tpu7x:2x2x1
jax: 0.10.0
libtpu: 0.0.40
codegen_flags: <defaults>
</compile_context>

<pallas_src>
import functools
import math

import jax
import jax.numpy as jnp
from jax.experimental import pallas as pl
from jax.experimental.pallas import tpu as pltpu


def _round_up(x, m):
    return -(-x // m) * m


# ----------------------------- in-kernel helpers -----------------------------

def _conv1d_k3_im2col(x, w_cat):
    """Conv1d(kernel=3, stride=1, padding=1, no bias) as ONE im2col MXU matmul.

    x:     (B, L, Ci) channel-last activations, float32.
    w_cat: (3*Ci, Co) host-pre-transposed weight; row block k multiplies the tap at
           l + k - 1 (k=0 -> l-1, k=1 -> l, k=2 -> l+1), matching PyTorch padding=1.
    Returns (B, L, Co) float32.
    """
    B, L, Ci = x.shape
    Co = w_cat.shape[1]
    zrow = jnp.zeros((B, 1, Ci), jnp.float32)
    xm1 = jnp.concatenate([zrow, x[:, : L - 1, :]], axis=1)   # tap l-1 (zero at l=0)
    xp1 = jnp.concatenate([x[:, 1:, :], zrow], axis=1)        # tap l+1 (zero at l=L-1)
    xcat = jnp.concatenate([xm1, x, xp1], axis=-1)            # (B, L, 3*Ci)
    y = jnp.dot(xcat.reshape(B * L, 3 * Ci), w_cat,
                preferred_element_type=jnp.float32)
    return y.reshape(B, L, Co)


def _maxpool2(x):
    """MaxPool1d(kernel=2, stride=2) over the length axis (channel-last)."""
    B, L, C = x.shape
    x4 = x.reshape(B, L // 2, 2, C)
    return jnp.maximum(x4[:, :, 0, :], x4[:, :, 1, :])


def _encode_kernel(total_layers, x_ref, *refs):
    """Full encode() hot path: conv stack + pools + fc1/relu + fc2 (lane-padded)."""
    conv_refs = refs[:total_layers]
    fc1w_ref, fc1b_ref, fc2w_ref, fc2b_ref = refs[total_layers:total_layers + 4]
    out_ref = refs[total_layers + 4]

    x = x_ref[...].astype(jnp.float32)                        # (tb, L, 2)

    # layer 0: conv -> ReLU -> pool
    x = _conv1d_k3_im2col(x, conv_refs[0][...])
    x = jnp.maximum(x, 0.0)
    x = _maxpool2(x)

    # layers 1..total_layers-1: conv -> pool (no ReLU, matches reference Sequential)
    for i in range(1, total_layers):
        x = _conv1d_k3_im2col(x, conv_refs[i][...])
        x = _maxpool2(x)

    # after log2(L) pools the length axis has collapsed to 1 -> flatten to (tb, C1)
    assert x.shape[1] == 1, "max_seq_length must be a power of two"
    feat = x.reshape(x.shape[0], x.shape[2])

    h = jnp.dot(feat, fc1w_ref[...], preferred_element_type=jnp.float32) + fc1b_ref[...]
    h = jnp.maximum(h, 0.0)
    out = jnp.dot(h, fc2w_ref[...], preferred_element_type=jnp.float32) + fc2b_ref[...]
    out_ref[...] = out.astype(out_ref.dtype)


# ------------------------------- host wrappers --------------------------------

def encode_pallas(x_blc, kparams, total_layers, batch_tile=256):
    """x_blc: (B, L, 2) channel-last lon/lat input (B may be 3*N after fusion).
    Returns (B, target_pad) — caller slices to target_size."""
    B, L, Cin = x_blc.shape
    target_pad = kparams["fc2_wT"].shape[1]                   # lane-padded (128)

    tb = min(batch_tile, B)
    n_blocks = -(-B // tb)
    Bp = n_blocks * tb
    if Bp != B:
        pad = jnp.zeros((Bp - B, L, Cin), x_blc.dtype)
        x_blc = jnp.concatenate([x_blc, pad], axis=0)

    weights = (list(kparams["conv_wcat"])
               + [kparams["fc1_wT"], kparams["fc1_b"],
                  kparams["fc2_wT"], kparams["fc2_b"]])

    in_specs = [pl.BlockSpec((tb, L, Cin), lambda i: (i, 0, 0))]
    for w in weights:                                         # full-array VMEM blocks
        in_specs.append(pl.BlockSpec(w.shape, lambda i: (0, 0)))

    kernel = functools.partial(_encode_kernel, total_layers)
    out = pl.pallas_call(
        kernel,
        out_shape=jax.ShapeDtypeStruct((Bp, target_pad), jnp.float32),
        grid=(n_blocks,),
        in_specs=in_specs,
        out_specs=pl.BlockSpec((tb, target_pad), lambda i: (i, 0)),
        compiler_params=pltpu.CompilerParams(
            dimension_semantics=("parallel",)),
    )(x_blc, *weights)
    return out[:B]


def simple_cnn_forward(lon, lat, lon_lat_image, kparams, total_layers):
    """Mirrors SimpleCNN.forward: lon/lat are (3, N, L, 1) stacks
    (anchor / positive / negative). All three encodes run in ONE pallas_call."""
    del lon_lat_image  # unused by the reference encode()
    S, N, L, _ = lon.shape
    # PyTorch: permute(0,2,1) then cat on channel dim -> (N, 2, L).
    # Channel-last equivalent: concatenate on the last axis -> (N, L, 2).
    x = jnp.concatenate([lon, lat], axis=-1).astype(jnp.float32)   # (3, N, L, 2)
    x = x.reshape(S * N, L, 2)
    out = encode_pallas(x, kparams, total_layers)                  # (3*N, target_pad)
    out = out[:, :kparams["target_size"]].reshape(S, N, -1)
    return out[0], out[1], out[2]


# --------------------------- parameter construction ---------------------------

def init_params(key, channel, max_seq_length, target_size):
    """Deterministic synthetic parameters in PyTorch layouts (raw)."""
    channel_1d = channel * 10
    total_layers = int(math.log2(max_seq_length))
    keys = jax.random.split(key, total_layers + 4)

    conv_ws = []
    w0 = jax.random.normal(keys[0], (channel_1d, 2, 3), jnp.float32) / math.sqrt(2 * 3)
    conv_ws.append(w0)
    for i in range(1, total_layers):
        wi = (jax.random.normal(keys[i], (channel_1d, channel_1d, 3), jnp.float32)
              / math.sqrt(channel_1d * 3))
        conv_ws.append(wi)

    fc1_w = (jax.random.normal(keys[total_layers], (channel_1d, channel_1d), jnp.float32)
             / math.sqrt(channel_1d))
    fc1_b = (jax.random.normal(keys[total_layers + 1], (channel_1d,), jnp.float32)
             / math.sqrt(channel_1d))
    fc2_w = (jax.random.normal(keys[total_layers + 2], (target_size, channel_1d), jnp.float32)
             / math.sqrt(channel_1d))
    fc2_b = (jax.random.normal(keys[total_layers + 3], (target_size,), jnp.float32)
             / math.sqrt(channel_1d))

    raw = {"conv_ws": conv_ws, "fc1_w": fc1_w, "fc1_b": fc1_b,
           "fc2_w": fc2_w, "fc2_b": fc2_b}
    return raw, total_layers, channel_1d


def prepare_kernel_params(raw, target_size, lane=128):
    """Host-side pre-transposes / padding so the kernel never transposes."""
    conv_wcat = []
    for w in raw["conv_ws"]:                      # (Co, Ci, 3) PyTorch layout
        Co, Ci, K = w.shape
        # row index = k*Ci + ci -> matches im2col column order [xm1 | x | xp1]
        conv_wcat.append(jnp.transpose(w, (2, 1, 0)).reshape(K * Ci, Co))

    c1 = raw["fc1_w"].shape[0]
    tpad = _round_up(target_size, lane)           # lane-dense fc2 output / store
    fc2_wT = jnp.zeros((c1, tpad), jnp.float32).at[:, :target_size].set(raw["fc2_w"].T)
    fc2_b = jnp.zeros((1, tpad), jnp.float32).at[:, :target_size].set(raw["fc2_b"][None, :])

    return {
        "conv_wcat": conv_wcat,
        "fc1_wT": jnp.asarray(raw["fc1_w"].T),    # (Cin, Cout)
        "fc1_b": raw["fc1_b"][None, :],           # (1, Cout)
        "fc2_wT": fc2_wT,                         # (Cin, 128)
        "fc2_b": fc2_b,                           # (1, 128)
        "target_size": target_size,
    }


# ---------------- independent pure-JAX reference (no shared helpers) ----------------

def _encode_ref(x_nlc, raw, total_layers):
    x = jnp.transpose(x_nlc, (0, 2, 1)).astype(jnp.float32)   # (N, C, L) like PyTorch
    for i in range(total_layers):
        x = jax.lax.conv_general_dilated(
            x, raw["conv_ws"][i], window_strides=(1,), padding=((1, 1),),
            dimension_numbers=("NCH", "OIH", "NCH"),
            precision=jax.lax.Precision.HIGHEST)
        if i == 0:
            x = jnp.maximum(x, 0.0)
        Nb, C, L = x.shape
        x = x.reshape(Nb, C, L // 2, 2).max(axis=-1)           # MaxPool1d(2)
    feat = x.reshape(x.shape[0], -1)
    h = jnp.maximum(feat @ raw["fc1_w"].T + raw["fc1_b"][None, :], 0.0)
    return h @ raw["fc2_w"].T + raw["fc2_b"][None, :]


if __name__ == "__main__":
    # small shapes consistent with the module
    batch = 2            # seq_num
    max_seq_length = 8   # L (power of two -> log2(L) conv/pool layers)
    channel = 4          # channel_1d = 40
    target_size = 8

    assert max_seq_length & (max_seq_length - 1) == 0, "max_seq_length must be a power of two"

    key = jax.random.PRNGKey(0)
    k_par, k_lon, k_lat, k_img = jax.random.split(key, 4)

    raw, total_layers, channel_1d = init_params(k_par, channel, max_seq_length, target_size)
    kparams = prepare_kernel_params(raw, target_size)

    # inputs_lon_array / inputs_lat_array: 3 stacks (anchor/pos/neg) of (N, L, 1)
    lon = jax.random.normal(k_lon, (3, batch, max_seq_length, 1), jnp.float32)
    lat = jax.random.normal(k_lat, (3, batch, max_seq_length, 1), jnp.float32)
    # image input exists in the signature but is unused by encode()
    img = jax.random.normal(k_img, (3, batch, 1, 16, 16), jnp.float32)

    anchor, positive, negative = simple_cnn_forward(lon, lat, img, kparams, total_layers)
    jax.block_until_ready((anchor, positive, negative))

    # sanity check vs. an independent lax.conv reference (tolerance covers MXU-pass
    # precision differences between the Pallas matmuls and HIGHEST-precision XLA conv)
    for i, out in enumerate((anchor, positive, negative)):
        x2 = jnp.concatenate([lon[i], lat[i]], axis=-1)
        ref = _encode_ref(x2, raw, total_layers)
        assert out.shape == (batch, target_size)
        assert jnp.allclose(out, ref, atol=2e-2, rtol=2e-2), (
            "max abs diff:", float(jnp.max(jnp.abs(out - ref))))

    print("KERNEL_OK")
</pallas_src>

<mosaic_0001>
module attributes {stable_mosaic.version = 11 : i64} {
  func.func @_encode_kernel(%arg0: i32, %arg1: memref<6x8x2xf32, #tpu.memory_space<vmem>>, %arg2: memref<6x40xf32, #tpu.memory_space<vmem>>, %arg3: memref<120x40xf32, #tpu.memory_space<vmem>>, %arg4: memref<120x40xf32, #tpu.memory_space<vmem>>, %arg5: memref<40x40xf32, #tpu.memory_space<vmem>>, %arg6: memref<1x40xf32, #tpu.memory_space<vmem>>, %arg7: memref<40x128xf32, #tpu.memory_space<vmem>>, %arg8: memref<1x128xf32, #tpu.memory_space<vmem>>, %arg9: memref<6x128xf32, #tpu.memory_space<vmem>>) attributes {dimension_semantics = [#tpu.dimension_semantics<parallel>], iteration_bounds = array<i64: 1>, scalar_prefetch = 0 : i64, scratch_operands = 0 : i64, tpu.core_type = #tpu.core_type<tc>, window_params = [{transform_indices = @transform_0, window_bounds = array<i64: 6, 8, 2>}, {pipeline_mode = #tpu.pipeline_mode<synchronous>, transform_indices = @transform_1, window_bounds = array<i64: 6, 40>}, {pipeline_mode = #tpu.pipeline_mode<synchronous>, transform_indices = @transform_2, window_bounds = array<i64: 120, 40>}, {pipeline_mode = #tpu.pipeline_mode<synchronous>, transform_indices = @transform_3, window_bounds = array<i64: 120, 40>}, {pipeline_mode = #tpu.pipeline_mode<synchronous>, transform_indices = @transform_4, window_bounds = array<i64: 40, 40>}, {pipeline_mode = #tpu.pipeline_mode<synchronous>, transform_indices = @transform_5, window_bounds = array<i64: 1, 40>}, {pipeline_mode = #tpu.pipeline_mode<synchronous>, transform_indices = @transform_6, window_bounds = array<i64: 40, 128>}, {pipeline_mode = #tpu.pipeline_mode<synchronous>, transform_indices = @transform_7, window_bounds = array<i64: 1, 128>}, {transform_indices = @transform_8, window_bounds = array<i64: 6, 128>}]} {
    %c0 = arith.constant 0 : index
    %c0_0 = arith.constant 0 : index
    %c0_1 = arith.constant 0 : index
    %0 = vector.load %arg1[%c0, %c0_0, %c0_1] : memref<6x8x2xf32, #tpu.memory_space<vmem>>, vector<6x8x2xf32>
    %c0_2 = arith.constant 0 : index
    %c0_3 = arith.constant 0 : index
    %1 = vector.load %arg2[%c0_2, %c0_3] : memref<6x40xf32, #tpu.memory_space<vmem>>, vector<6x40xf32>
    %cst = arith.constant 0.000000e+00 : f32
    %2 = vector.broadcast %cst : f32 to vector<6x1x2xf32>
    %3 = vector.extract_strided_slice %0 {offsets = [0, 0, 0], sizes = [6, 7, 2], strides = [1, 1, 1]} : vector<6x8x2xf32> to vector<6x7x2xf32>
    %4 = tpu.concatenate %2, %3 in 1 : vector<6x1x2xf32>, vector<6x7x2xf32> -> vector<6x8x2xf32>
    %5 = vector.extract_strided_slice %0 {offsets = [0, 1, 0], sizes = [6, 7, 2], strides = [1, 1, 1]} : vector<6x8x2xf32> to vector<6x7x2xf32>
    %6 = tpu.concatenate %5, %2 in 1 : vector<6x7x2xf32>, vector<6x1x2xf32> -> vector<6x8x2xf32>
    %7 = tpu.concatenate %4, %0, %6 in 2 : vector<6x8x2xf32>, vector<6x8x2xf32>, vector<6x8x2xf32> -> vector<6x8x6xf32>
    %8 = vector.shape_cast %7 : vector<6x8x6xf32> to vector<48x6xf32>
    %cst_4 = arith.constant dense<0.000000e+00> : vector<48x40xf32>
    %9 = tpu.matmul %8, %1, %cst_4 {dimension_numbers = #tpu.dot_dimension_numbers<[1], [0], [0], [1], [0, 0, 1, 1], [], []>} : vector<48x6xf32>, vector<6x40xf32>, vector<48x40xf32> -> vector<48x40xf32>
    %10 = vector.shape_cast %9 : vector<48x40xf32> to vector<6x8x40xf32>
    %cst_5 = arith.constant 0.000000e+00 : f32
    %11 = vector.broadcast %cst_5 : f32 to vector<6x8x40xf32>
    %12 = arith.maximumf %10, %11 : vector<6x8x40xf32>
    %13 = vector.shape_cast %12 : vector<6x8x40xf32> to vector<6x4x2x40xf32>
    %14 = vector.extract_strided_slice %13 {offsets = [0, 0, 0, 0], sizes = [6, 4, 1, 40], strides = [1, 1, 1, 1]} : vector<6x4x2x40xf32> to vector<6x4x1x40xf32>
    %15 = vector.shape_cast %14 : vector<6x4x1x40xf32> to vector<6x4x40xf32>
    %16 = vector.extract_strided_slice %13 {offsets = [0, 0, 1, 0], sizes = [6, 4, 1, 40], strides = [1, 1, 1, 1]} : vector<6x4x2x40xf32> to vector<6x4x1x40xf32>
    %17 = vector.shape_cast %16 : vector<6x4x1x40xf32> to vector<6x4x40xf32>
    %18 = arith.maximumf %15, %17 : vector<6x4x40xf32>
    %c0_6 = arith.constant 0 : index
    %c0_7 = arith.constant 0 : index
    %19 = vector.load %arg3[%c0_6, %c0_7] : memref<120x40xf32, #tpu.memory_space<vmem>>, vector<120x40xf32>
    %cst_8 = arith.constant 0.000000e+00 : f32
    %20 = vector.broadcast %cst_8 : f32 to vector<6x1x40xf32>
    %21 = vector.extract_strided_slice %18 {offsets = [0, 0, 0], sizes = [6, 3, 40], strides = [1, 1, 1]} : vector<6x4x40xf32> to vector<6x3x40xf32>
    %22 = tpu.concatenate %20, %21 in 1 : vector<6x1x40xf32>, vector<6x3x40xf32> -> vector<6x4x40xf32>
    %23 = vector.extract_strided_slice %18 {offsets = [0, 1, 0], sizes = [6, 3, 40], strides = [1, 1, 1]} : vector<6x4x40xf32> to vector<6x3x40xf32>
    %24 = tpu.concatenate %23, %20 in 1 : vector<6x3x40xf32>, vector<6x1x40xf32> -> vector<6x4x40xf32>
    %25 = tpu.concatenate %22, %18, %24 in 2 : vector<6x4x40xf32>, vector<6x4x40xf32>, vector<6x4x40xf32> -> vector<6x4x120xf32>
    %26 = vector.shape_cast %25 : vector<6x4x120xf32> to vector<24x120xf32>
    %cst_9 = arith.constant dense<0.000000e+00> : vector<24x40xf32>
    %27 = tpu.matmul %26, %19, %cst_9 {dimension_numbers = #tpu.dot_dimension_numbers<[1], [0], [0], [1], [0, 0, 1, 1], [], []>} : vector<24x120xf32>, vector<120x40xf32>, vector<24x40xf32> -> vector<24x40xf32>
    %28 = vector.shape_cast %27 : vector<24x40xf32> to vector<6x4x40xf32>
    %29 = vector.shape_cast %28 : vector<6x4x40xf32> to vector<6x2x2x40xf32>
    %30 = vector.extract_strided_slice %29 {offsets = [0, 0, 0, 0], sizes = [6, 2, 1, 40], strides = [1, 1, 1, 1]} : vector<6x2x2x40xf32> to vector<6x2x1x40xf32>
    %31 = vector.shape_cast %30 : vector<6x2x1x40xf32> to vector<6x2x40xf32>
    %32 = vector.extract_strided_slice %29 {offsets = [0, 0, 1, 0], sizes = [6, 2, 1, 40], strides = [1, 1, 1, 1]} : vector<6x2x2x40xf32> to vector<6x2x1x40xf32>
    %33 = vector.shape_cast %32 : vector<6x2x1x40xf32> to vector<6x2x40xf32>
    %34 = arith.maximumf %31, %33 : vector<6x2x40xf32>
    %c0_10 = arith.constant 0 : index
    %c0_11 = arith.constant 0 : index
    %35 = vector.load %arg4[%c0_10, %c0_11] : memref<120x40xf32, #tpu.memory_space<vmem>>, vector<120x40xf32>
    %cst_12 = arith.constant 0.000000e+00 : f32
    %36 = vector.broadcast %cst_12 : f32 to vector<6x1x40xf32>
    %37 = vector.extract_strided_slice %34 {offsets = [0, 0, 0], sizes = [6, 1, 40], strides = [1, 1, 1]} : vector<6x2x40xf32> to vector<6x1x40xf32>
    %38 = tpu.concatenate %36, %37 in 1 : vector<6x1x40xf32>, vector<6x1x40xf32> -> vector<6x2x40xf32>
    %39 = vector.extract_strided_slice %34 {offsets = [0, 1, 0], sizes = [6, 1, 40], strides = [1, 1, 1]} : vector<6x2x40xf32> to vector<6x1x40xf32>
    %40 = tpu.concatenate %39, %36 in 1 : vector<6x1x40xf32>, vector<6x1x40xf32> -> vector<6x2x40xf32>
    %41 = tpu.concatenate %38, %34, %40 in 2 : vector<6x2x40xf32>, vector<6x2x40xf32>, vector<6x2x40xf32> -> vector<6x2x120xf32>
    %42 = vector.shape_cast %41 : vector<6x2x120xf32> to vector<12x120xf32>
    %cst_13 = arith.constant dense<0.000000e+00> : vector<12x40xf32>
    %43 = tpu.matmul %42, %35, %cst_13 {dimension_numbers = #tpu.dot_dimension_numbers<[1], [0], [0], [1], [0, 0, 1, 1], [], []>} : vector<12x120xf32>, vector<120x40xf32>, vector<12x40xf32> -> vector<12x40xf32>
    %44 = vector.shape_cast %43 : vector<12x40xf32> to vector<6x2x40xf32>
    %45 = vector.shape_cast %44 : vector<6x2x40xf32> to vector<6x1x2x40xf32>
    %46 = vector.extract_strided_slice %45 {offsets = [0, 0, 0, 0], sizes = [6, 1, 1, 40], strides = [1, 1, 1, 1]} : vector<6x1x2x40xf32> to vector<6x1x1x40xf32>
    %47 = vector.shape_cast %46 : vector<6x1x1x40xf32> to vector<6x1x40xf32>
    %48 = vector.extract_strided_slice %45 {offsets = [0, 0, 1, 0], sizes = [6, 1, 1, 40], strides = [1, 1, 1, 1]} : vector<6x1x2x40xf32> to vector<6x1x1x40xf32>
    %49 = vector.shape_cast %48 : vector<6x1x1x40xf32> to vector<6x1x40xf32>
    %50 = arith.maximumf %47, %49 : vector<6x1x40xf32>
    %51 = vector.shape_cast %50 : vector<6x1x40xf32> to vector<6x40xf32>
    %c0_14 = arith.constant 0 : index
    %c0_15 = arith.constant 0 : index
    %52 = vector.load %arg5[%c0_14, %c0_15] : memref<40x40xf32, #tpu.memory_space<vmem>>, vector<40x40xf32>
    %cst_16 = arith.constant dense<0.000000e+00> : vector<6x40xf32>
    %53 = tpu.matmul %51, %52, %cst_16 {dimension_numbers = #tpu.dot_dimension_numbers<[1], [0], [0], [1], [0, 0, 1, 1], [], []>} : vector<6x40xf32>, vector<40x40xf32>, vector<6x40xf32> -> vector<6x40xf32>
    %c0_17 = arith.constant 0 : index
    %c0_18 = arith.constant 0 : index
    %54 = vector.load %arg6[%c0_17, %c0_18] : memref<1x40xf32, #tpu.memory_space<vmem>>, vector<1x40xf32>
    %55 = vector.broadcast %54 : vector<1x40xf32> to vector<6x40xf32>
    %56 = arith.addf %53, %55 : vector<6x40xf32>
    %cst_19 = arith.constant 0.000000e+00 : f32
    %57 = vector.broadcast %cst_19 : f32 to vector<6x40xf32>
    %58 = arith.maximumf %56, %57 : vector<6x40xf32>
    %c0_20 = arith.constant 0 : index
    %c0_21 = arith.constant 0 : index
    %59 = vector.load %arg7[%c0_20, %c0_21] : memref<40x128xf32, #tpu.memory_space<vmem>>, vector<40x128xf32>
    %cst_22 = arith.constant dense<0.000000e+00> : vector<6x128xf32>
    %60 = tpu.matmul %58, %59, %cst_22 {dimension_numbers = #tpu.dot_dimension_numbers<[1], [0], [0], [1], [0, 0, 1, 1], [], []>} : vector<6x40xf32>, vector<40x128xf32>, vector<6x128xf32> -> vector<6x128xf32>
    %c0_23 = arith.constant 0 : index
    %c0_24 = arith.constant 0 : index
    %61 = vector.load %arg8[%c0_23, %c0_24] : memref<1x128xf32, #tpu.memory_space<vmem>>, vector<1x128xf32>
    %62 = vector.broadcast %61 : vector<1x128xf32> to vector<6x128xf32>
    %63 = arith.addf %60, %62 : vector<6x128xf32>
    %c0_25 = arith.constant 0 : index
    %c0_26 = arith.constant 0 : index
    %64 = vector.load %arg9[%c0_25, %c0_26] : memref<6x128xf32, #tpu.memory_space<vmem>>, vector<6x128xf32>
    tpu.vector_store %arg9[%c0_25, %c0_26], %63 {strides = array<i32>} : memref<6x128xf32, #tpu.memory_space<vmem>>, vector<6x128xf32>,
    return
  }
  func.func @transform_0(%arg0: i32) -> (i32, i32, i32) {
    %c0_i32 = arith.constant 0 : i32
    %c0_i32_0 = arith.constant 0 : i32
    %c0_i32_1 = arith.constant 0 : i32
    return %arg0, %c0_i32, %c0_i32_0 : i32, i32, i32
  }
  func.func @transform_1(%arg0: i32) -> (i32, i32) {
    %c0_i32 = arith.constant 0 : i32
    %c0_i32_0 = arith.constant 0 : i32
    %c0_i32_1 = arith.constant 0 : i32
    return %c0_i32, %c0_i32_0 : i32, i32
  }
  func.func @transform_2(%arg0: i32) -> (i32, i32) {
    %c0_i32 = arith.constant 0 : i32
    %c0_i32_0 = arith.constant 0 : i32
    %c0_i32_1 = arith.constant 0 : i32
    return %c0_i32, %c0_i32_0 : i32, i32
  }
  func.func @transform_3(%arg0: i32) -> (i32, i32) {
    %c0_i32 = arith.constant 0 : i32
    %c0_i32_0 = arith.constant 0 : i32
    %c0_i32_1 = arith.constant 0 : i32
    return %c0_i32, %c0_i32_0 : i32, i32
  }
  func.func @transform_4(%arg0: i32) -> (i32, i32) {
    %c0_i32 = arith.constant 0 : i32
    %c0_i32_0 = arith.constant 0 : i32
    %c0_i32_1 = arith.constant 0 : i32
    return %c0_i32, %c0_i32_0 : i32, i32
  }
  func.func @transform_5(%arg0: i32) -> (i32, i32) {
    %c0_i32 = arith.constant 0 : i32
    %c0_i32_0 = arith.constant 0 : i32
    %c0_i32_1 = arith.constant 0 : i32
    return %c0_i32, %c0_i32_0 : i32, i32
  }
  func.func @transform_6(%arg0: i32) -> (i32, i32) {
    %c0_i32 = arith.constant 0 : i32
    %c0_i32_0 = arith.constant 0 : i32
    %c0_i32_1 = arith.constant 0 : i32
    return %c0_i32, %c0_i32_0 : i32, i32
  }
  func.func @transform_7(%arg0: i32) -> (i32, i32) {
    %c0_i32 = arith.constant 0 : i32
    %c0_i32_0 = arith.constant 0 : i32
    %c0_i32_1 = arith.constant 0 : i32
    return %c0_i32, %c0_i32_0 : i32, i32
  }
  func.func @transform_8(%arg0: i32) -> (i32, i32) {
    %c0_i32 = arith.constant 0 : i32
    %c0_i32_0 = arith.constant 0 : i32
    return %arg0, %c0_i32 : i32, i32
  }
}

</mosaic_0001>

<llo_original>
// kernel: tpu_custom_call.1
$region0: #{tpu_custom_call.1}
  #allocation0 [shape = 'u32[]', space=smem, size = 0x4, offset = 0x4, fixed_abs, tag = 'smem constant byte address 0x4 - core index']
  #allocation1 [shape = 'u32[144,128]{1,0:T(1,128)}', space=vmem, size = 0x12000, scoped, tag = 'internal scratch']
  %s0 = inlined_call_operand.vmem [shape: f32[6,8,2], index: 0, kind: input, shape index: {}]
  %s1 = inlined_call_operand.vmem [shape: f32[6,40], index: 1, kind: input, shape index: {}]
  %s2 = inlined_call_operand.vmem [shape: f32[120,40], index: 2, kind: input, shape index: {}]
  %s3 = inlined_call_operand.vmem [shape: f32[120,40], index: 3, kind: input, shape index: {}]
  %s4 = inlined_call_operand.vmem [shape: f32[40,40], index: 4, kind: input, shape index: {}]
  %s5 = inlined_call_operand.vmem [shape: f32[1,40], index: 5, kind: input, shape index: {}]
  %s6 = inlined_call_operand.vmem [shape: f32[40,128], index: 6, kind: input, shape index: {}]
  %s7 = inlined_call_operand.vmem [shape: f32[1,128], index: 7, kind: input, shape index: {}]
  %s8 = inlined_call_operand.hbm [shape: f32[6,128], index: 8, kind: output, shape index: {}]
  %s9 = sld [smem:[#allocation0]]
  $region42: #{tpu_custom_call.1} parent=0
    _
  %s11 = ssub.s32 1, %s9
  %s12 = scalar_select 0, %s11, %s9
  $region1: #{tpu_custom_call.1} parent=0
    #allocation2 [shape = 'u8[4096]{0}', space=vmem, size = 0x1000, scoped, tag = 'output window, operand 0, single buffered']
    #allocation3 [shape = 's32[1]{0}', space=sflag, size = 0x4, scoped, tag = 'scoped memory for tpu_custom_call.1']
    %13 = vsyncpa [#allocation3], 0
    // Predicated region
    $region2: #{tpu_custom_call.1} parent=1 // pred_check
      _
    $region3: #{tpu_custom_call.1} parent=1 // pred_check_branch
      %15 = sbr.rel (0) target = $region5
    $region4: #{tpu_custom_call.1} parent=1 // pred_region
      _
    $region5: #{tpu_custom_call.1} parent=1 // pred_fallthru
      _
    // Predicated region
    $region6: #{tpu_custom_call.1} parent=1 // pred_check
      _
    $region7: #{tpu_custom_call.1} parent=1 // pred_check_branch
      %17 = sbr.rel (0) target = $region9
    $region8: #{tpu_custom_call.1} parent=1 // pred_region
      _
    $region9: #{tpu_custom_call.1} parent=1 // pred_fallthru
      _
    // Predicated region
    $region10: #{tpu_custom_call.1} parent=1 // pred_check
      _
    $region11: #{tpu_custom_call.1} parent=1 // pred_check_branch
      %19 = sbr.rel (0) target = $region13
    $region12: #{tpu_custom_call.1} parent=1 // pred_region
      _
    $region13: #{tpu_custom_call.1} parent=1 // pred_fallthru
      _
    // Predicated region
    $region14: #{tpu_custom_call.1} parent=1 // pred_check
      _
    $region15: #{tpu_custom_call.1} parent=1 // pred_check_branch
      %21 = sbr.rel (0) target = $region17
    $region16: #{tpu_custom_call.1} parent=1 // pred_region
      _
    $region17: #{tpu_custom_call.1} parent=1 // pred_fallthru
      _
    // Predicated region
    $region18: #{tpu_custom_call.1} parent=1 // pred_check
      _
    $region19: #{tpu_custom_call.1} parent=1 // pred_check_branch
      %23 = sbr.rel (0) target = $region21
    $region20: #{tpu_custom_call.1} parent=1 // pred_region
      _
    $region21: #{tpu_custom_call.1} parent=1 // pred_fallthru
      _
    // Predicated region
    $region22: #{tpu_custom_call.1} parent=1 // pred_check
      _
    $region23: #{tpu_custom_call.1} parent=1 // pred_check_branch
      %25 = sbr.rel (0) target = $region25
    $region24: #{tpu_custom_call.1} parent=1 // pred_region
      _
    $region25: #{tpu_custom_call.1} parent=1 // pred_fallthru
      _
    // Predicated region
    $region26: #{tpu_custom_call.1} parent=1 // pred_check
      _
    $region27: #{tpu_custom_call.1} parent=1 // pred_check_branch
      %27 = sbr.rel (0) target = $region29
    $region28: #{tpu_custom_call.1} parent=1 // pred_region
      _
    $region29: #{tpu_custom_call.1} parent=1 // pred_fallthru
      _
    // Predicated region
    $region30: #{tpu_custom_call.1} parent=1 // pred_check
      _
    $region31: #{tpu_custom_call.1} parent=1 // pred_check_branch
      %29 = sbr.rel (0) target = $region33
    $region32: #{tpu_custom_call.1} parent=1 // pred_region
      _
    $region33: #{tpu_custom_call.1} parent=1 // pred_fallthru
      _
    %v30 = vld [vmem:[%s0] sm:$0xff]
    %v31 = vld [vmem:[%s0 + $0x8] sm:$0xff]
    %v32 = vld [vmem:[%s0 + $0x10] sm:$0xff]
    %v33 = vld [vmem:[%s0 + $0x18] sm:$0xff]
    %v34 = vld [vmem:[%s0 + $0x20] sm:$0xff]
    %v35 = vld [vmem:[%s0 + $0x28] sm:$0xff]
    %v36 = vld [vmem:[%s1] sm:$0x3f]
    %v43 = vrot.slane %v30, 7
    %v44 = vrot.slane %v31, 7
    %v45 = vrot.slane %v32, 7
    %v46 = vrot.slane %v33, 7
    %v47 = vrot.slane %v34, 7
    %v48 = vrot.slane %v35, 7
    %vm55 = vcmask 1040384
    %v56 = vsel %vm55, 0.0, %v43
    %v57 = vsel %vm55, 0.0, %v44
    %v58 = vsel %vm55, 0.0, %v45
    %v59 = vsel %vm55, 0.0, %v46
    %v60 = vsel %vm55, 0.0, %v47
    %v61 = vsel %vm55, 0.0, %v48
    %v62 = vrot.slane %v30, 1
    %v63 = vrot.slane %v31, 1
    %v64 = vrot.slane %v32, 1
    %v65 = vrot.slane %v33, 1
    %v66 = vrot.slane %v34, 1
    %v67 = vrot.slane %v35, 1
    %vm74 = vcmask 1046528
    %v75 = vsel %vm74, %v62, 0.0
    %v76 = vsel %vm74, %v63, 0.0
    %v77 = vsel %vm74, %v64, 0.0
    %v78 = vsel %vm74, %v65, 0.0
    %v79 = vsel %vm74, %v66, 0.0
    %v80 = vsel %vm74, %v67, 0.0
    %81 = vrot.lane.b32.xlu0 %v30, 2
    %v82 = vpop.permute.xlu0 %81
    %83 = vrot.lane.b32.xlu0 %v31, 2
    %v84 = vpop.permute.xlu0 %83
    %85 = vrot.lane.b32.xlu0 %v32, 2
    %v86 = vpop.permute.xlu0 %85
    %87 = vrot.lane.b32.xlu0 %v33, 2
    %v88 = vpop.permute.xlu0 %87
    %89 = vrot.lane.b32.xlu0 %v34, 2
    %v90 = vpop.permute.xlu0 %89
    %91 = vrot.lane.b32.xlu0 %v35, 2
    %v92 = vpop.permute.xlu0 %91
    %105 = vrot.lane.b32.xlu0 %v75, 4
    %v106 = vpop.permute.xlu0 %105
    %107 = vrot.lane.b32.xlu0 %v76, 4
    %v108 = vpop.permute.xlu0 %107
    %109 = vrot.lane.b32.xlu0 %v77, 4
    %v110 = vpop.permute.xlu0 %109
    %111 = vrot.lane.b32.xlu0 %v78, 4
    %v112 = vpop.permute.xlu0 %111
    %113 = vrot.lane.b32.xlu0 %v79, 4
    %v114 = vpop.permute.xlu0 %113
    %115 = vrot.lane.b32.xlu0 %v80, 4
    %v116 = vpop.permute.xlu0 %115
    %vm123 = vcmask 15360
    %v124 = vsel %vm123, %v56, %v82
    %v125 = vsel %vm123, %v57, %v84
    %v126 = vsel %vm123, %v58, %v86
    %v127 = vsel %vm123, %v59, %v88
    %v128 = vsel %vm123, %v60, %v90
    %v129 = vsel %vm123, %v61, %v92
    %vm130 = vcmask 31744
    %v131 = vsel %vm130, %v124, %v106
    %v132 = vsel %vm130, %v125, %v108
    %v133 = vsel %vm130, %v126, %v110
    %v134 = vsel %vm130, %v127, %v112
    %v135 = vsel %vm130, %v128, %v114
    %v136 = vsel %vm130, %v129, %v116
    %vm137 = vcmask 48128
    %v139 = vsel %vm137, %v131, 0
    %v142 = vsel %vm137, %v132, 0
    %v145 = vsel %vm137, %v133, 0
    %v148 = vsel %vm137, %v134, 0
    %v151 = vsel %vm137, %v135, 0
    %v154 = vsel %vm137, %v136, 0
    %vm156 = vcmask 1045504
    %v158 = vsel %vm156, %v36, 0
    %160 = vmatprep.subr.mxu0 0.0
    %161 = vmatpush1.msra.mxu0 %v158
    %162 = vmatprep.subr.mxu0 0.0
    %163 = vmatpush1.msra.mxu0 0.0
    %164 = vmatprep.subr.mxu0 0.0
    %165 = vmatpush1.msra.mxu0 0.0
    %166 = vmatprep.subr.mxu0 0.0
    %167 = vmatpush1.msra.mxu0 0.0
    %168 = vmatprep.subr.mxu0 0.0
    %169 = vmatpush1.msra.mxu0 0.0
    %170 = vmatprep.subr.mxu0 0.0
    %171 = vmatpush1.msra.mxu0 0.0
    %172 = vmatprep.subr.mxu0 0.0
    %173 = vmatpush1.msra.mxu0 0.0
    %174 = vmatprep.subr.mxu0 0.0
    %175 = vmatpush1.msra.mxu0 0.0
    %176 = vmatprep.subr.mxu0 0.0
    %177 = vmatpush1.msra.mxu0 0.0
    %178 = vmatprep.subr.mxu0 0.0
    %179 = vmatpush1.msra.mxu0 0.0
    %180 = vmatprep.subr.mxu0 0.0
    %181 = vmatpush1.msra.mxu0 0.0
    %182 = vmatprep.subr.mxu0 0.0
    %183 = vmatpush1.msra.mxu0 0.0
    %184 = vmatprep.subr.mxu0 0.0
    %185 = vmatpush1.msra.mxu0 0.0
    %186 = vmatprep.subr.mxu0 0.0
    %187 = vmatpush1.msra.mxu0 0.0
    %188 = vmatprep.subr.mxu0 0.0
    %189 = vmatpush1.msra.mxu0 0.0
    %190 = vmatprep.subr.mxu0 0.0
    %191 = vmatpush1.msra.mxu0 0.0
    %192 = vmatprep.subr.mxu0 0.0
    %193 = vmatpush1.msra.mxu0 0.0
    %194 = vmatprep.subr.mxu0 0.0
    %195 = vmatpush1.msra.mxu0 0.0
    %196 = vmatprep.subr.mxu0 0.0
    %197 = vmatpush1.msra.mxu0 0.0
    %198 = vmatprep.subr.mxu0 0.0
    %199 = vmatpush1.msra.mxu0 0.0
    %200 = vmatprep.subr.mxu0 0.0
    %201 = vmatpush1.msra.mxu0 0.0
    %202 = vmatprep.subr.mxu0 0.0
    %203 = vmatpush1.msra.mxu0 0.0
    %204 = vmatprep.subr.mxu0 0.0
    %205 = vmatpush1.msra.mxu0 0.0
    %206 = vmatprep.subr.mxu0 0.0
    %207 = vmatpush1.msra.mxu0 0.0
    %208 = vmatprep.subr.mxu0 0.0
    %209 = vmatpush1.msra.mxu0 0.0
    %210 = vmatprep.subr.mxu0 0.0
    %211 = vmatpush1.msra.mxu0 0.0
    %212 = vmatprep.subr.mxu0 0.0
    %213 = vmatpush1.msra.mxu0 0.0
    %214 = vmatprep.subr.mxu0 0.0
    %215 = vmatpush1.msra.mxu0 0.0
    %216 = vmatprep.subr.mxu0 0.0
    %217 = vmatpush1.msra.mxu0 0.0
    %218 = vmatprep.subr.mxu0 0.0
    %219 = vmatpush1.msra.mxu0 0.0
    %220 = vmatprep.subr.mxu0 0.0
    %221 = vmatpush1.msra.mxu0 0.0
    %222 = vmatprep.subr.mxu0 0.0
    %223 = vmatpush1.msra.mxu0 0.0
    %224 = vmatprep.mubr.f32.mxu0 0.0
    %225 = vmatmul.mubr.f32.gmra.mrb[0].mxu0 %v139
    %v226 = vpop.f32.mrb[0].mxu0
    %v227 = vadd.f32 0.0, %v226
    %v228 = vpop.f32.mrb[0].mxu0
    %229 = vmatprep.mubr.f32.mxu0 0.0
    %230 = vmatmul.mubr.f32.gmra.mrb[0].mxu0 %v142
    %v231 = vpop.f32.mrb[0].mxu0
    %v232 = vadd.f32 0.0, %v231
    %v233 = vpop.f32.mrb[0].mxu0
    %234 = vmatprep.mubr.f32.mxu0 0.0
    %235 = vmatmul.mubr.f32.gmra.mrb[0].mxu0 %v145
    %v236 = vpop.f32.mrb[0].mxu0
    %v237 = vadd.f32 0.0, %v236
    %v238 = vpop.f32.mrb[0].mxu0
    %239 = vmatprep.mubr.f32.mxu0 0.0
    %240 = vmatmul.mubr.f32.gmra.mrb[0].mxu0 %v148
    %v241 = vpop.f32.mrb[0].mxu0
    %v242 = vadd.f32 0.0, %v241
    %v243 = vpop.f32.mrb[0].mxu0
    %244 = vmatprep.mubr.f32.mxu0 0.0
    %245 = vmatmul.mubr.f32.gmra.mrb[0].mxu0 %v151
    %v246 = vpop.f32.mrb[0].mxu0
    %v247 = vadd.f32 0.0, %v246
    %v248 = vpop.f32.mrb[0].mxu0
    %249 = vmatprep.mubr.f32.mxu0 0.0
    %250 = vmatmul.mubr.f32.gmra.mrb[0].mxu0 %v154
    %v251 = vpop.f32.mrb[0].mxu0
    %v252 = vadd.f32 0.0, %v251
    %v253 = vpop.f32.mrb[0].mxu0
    %254 = vdwg.mxu0
    %v255 = vmax.f32 %v227, 0.0
    %v256 = vmax.f32 %v232, 0.0
    %v257 = vmax.f32 %v237, 0.0
    %v258 = vmax.f32 %v242, 0.0
    %v259 = vmax.f32 %v247, 0.0
    %v260 = vmax.f32 %v252, 0.0
    %v267 = vcombine.high %v255, %v255
    %v269 = vunpack.c.l.s4 1983009808
    %v270 = vunpack.c.0.s8 %v269
    %v271 = vlaneseq
    %v272 = vshrl.u32 %v271, 7
    %v273 = vsub.s32 %v270, %v272
    %v274 = vrot.slane %v255, %v273
    %v276 = vunpack.c.l.s4 1983009808
    %v277 = vunpack.c.0.s8 %v276
    %v278 = vlaneseq
    %v279 = vshrl.u32 %v278, 7
    %v280 = vsub.s32 %v277, %v279
    %v281 = vrot.slane %v267, %v280
    %v282 = vcombine.high %v274, %v274
    %v283 = vcombine.high %v281, %v281
    %v284 = vcombine.high %v256, %v256
    %v286 = vunpack.c.l.s4 1983009808
    %v287 = vunpack.c.0.s8 %v286
    %v288 = vlaneseq
    %v289 = vshrl.u32 %v288, 7
    %v290 = vsub.s32 %v287, %v289
    %v291 = vrot.slane %v256, %v290
    %v293 = vunpack.c.l.s4 1983009808
    %v294 = vunpack.c.0.s8 %v293
    %v295 = vlaneseq
    %v296 = vshrl.u32 %v295, 7
    %v297 = vsub.s32 %v294, %v296
    %v298 = vrot.slane %v284, %v297
    %v299 = vcombine.high %v291, %v291
    %v300 = vcombine.high %v298, %v298
    %v301 = vcombine.high %v257, %v257
    %v303 = vunpack.c.l.s4 1983009808
    %v304 = vunpack.c.0.s8 %v303
    %v305 = vlaneseq
    %v306 = vshrl.u32 %v305, 7
    %v307 = vsub.s32 %v304, %v306
    %v308 = vrot.slane %v257, %v307
    %v310 = vunpack.c.l.s4 1983009808
    %v311 = vunpack.c.0.s8 %v310
    %v312 = vlaneseq
    %v313 = vshrl.u32 %v312, 7
    %v314 = vsub.s32 %v311, %v313
    %v315 = vrot.slane %v301, %v314
    %v316 = vcombine.high %v308, %v308
    %v317 = vcombine.high %v315, %v315
    %v318 = vcombine.high %v258, %v258
    %v320 = vunpack.c.l.s4 1983009808
    %v321 = vunpack.c.0.s8 %v320
    %v322 = vlaneseq
    %v323 = vshrl.u32 %v322, 7
    %v324 = vsub.s32 %v321, %v323
    %v325 = vrot.slane %v258, %v324
    %v327 = vunpack.c.l.s4 1983009808
    %v328 = vunpack.c.0.s8 %v327
    %v329 = vlaneseq
    %v330 = vshrl.u32 %v329, 7
    %v331 = vsub.s32 %v328, %v330
    %v332 = vrot.slane %v318, %v331
    %v333 = vcombine.high %v325, %v325
    %v334 = vcombine.high %v332, %v332
    %v335 = vcombine.high %v259, %v259
    %v337 = vunpack.c.l.s4 1983009808
    %v338 = vunpack.c.0.s8 %v337
    %v339 = vlaneseq
    %v340 = vshrl.u32 %v339, 7
    %v341 = vsub.s32 %v338, %v340
    %v342 = vrot.slane %v259, %v341
    %v344 = vunpack.c.l.s4 1983009808
    %v345 = vunpack.c.0.s8 %v344
    %v346 = vlaneseq
    %v347 = vshrl.u32 %v346, 7
    %v348 = vsub.s32 %v345, %v347
    %v349 = vrot.slane %v335, %v348
    %v350 = vcombine.high %v342, %v342
    %v351 = vcombine.high %v349, %v349
    %v352 = vcombine.high %v260, %v260
    %v354 = vunpack.c.l.s4 1983009808
    %v355 = vunpack.c.0.s8 %v354
    %v356 = vlaneseq
    %v357 = vshrl.u32 %v356, 7
    %v358 = vsub.s32 %v355, %v357
    %v359 = vrot.slane %v260, %v358
    %v361 = vunpack.c.l.s4 1983009808
    %v362 = vunpack.c.0.s8 %v361
    %v363 = vlaneseq
    %v364 = vshrl.u32 %v363, 7
    %v365 = vsub.s32 %v362, %v364
    %v366 = vrot.slane %v352, %v365
    %v367 = vcombine.high %v359, %v359
    %v368 = vcombine.high %v366, %v366
    %v393 = vrot.slane %v274, 7
    %v394 = vrot.slane %v393, 2
    %v395 = vrot.slane %v282, 7
    %v396 = vrot.slane %v395, 2
    %v397 = vrot.slane %v281, 7
    %v398 = vrot.slane %v397, 2
    %v399 = vrot.slane %v283, 7
    %v400 = vrot.slane %v399, 2
    %v401 = vrot.slane %v291, 7
    %v402 = vrot.slane %v401, 2
    %v403 = vrot.slane %v299, 7
    %v404 = vrot.slane %v403, 2
    %v405 = vrot.slane %v298, 7
    %v406 = vrot.slane %v405, 2
    %v407 = vrot.slane %v300, 7
    %v408 = vrot.slane %v407, 2
    %v409 = vrot.slane %v308, 7
    %v410 = vrot.slane %v409, 2
    %v411 = vrot.slane %v316, 7
    %v412 = vrot.slane %v411, 2
    %v413 = vrot.slane %v315, 7
    %v414 = vrot.slane %v413, 2
    %v415 = vrot.slane %v317, 7
    %v416 = vrot.slane %v415, 2
    %v417 = vrot.slane %v325, 7
    %v418 = vrot.slane %v417, 2
    %v419 = vrot.slane %v333, 7
    %v420 = vrot.slane %v419, 2
    %v421 = vrot.slane %v332, 7
    %v422 = vrot.slane %v421, 2
    %v423 = vrot.slane %v334, 7
    %v424 = vrot.slane %v423, 2
    %v425 = vrot.slane %v342, 7
    %v426 = vrot.slane %v425, 2
    %v427 = vrot.slane %v350, 7
    %v428 = vrot.slane %v427, 2
    %v429 = vrot.slane %v349, 7
    %v430 = vrot.slane %v429, 2
    %v431 = vrot.slane %v351, 7
    %v432 = vrot.slane %v431, 2
    %v433 = vrot.slane %v359, 7
    %v434 = vrot.slane %v433, 2
    %v435 = vrot.slane %v367, 7
    %v436 = vrot.slane %v435, 2
    %v437 = vrot.slane %v366, 7
    %v438 = vrot.slane %v437, 2
    %v439 = vrot.slane %v368, 7
    %v440 = vrot.slane %v439, 2
    %v465 = vmax.f32 %v274, %v394
    %v466 = vmax.f32 %v282, %v396
    %v467 = vmax.f32 %v281, %v398
    %v468 = vmax.f32 %v283, %v400
    %v469 = vmax.f32 %v291, %v402
    %v470 = vmax.f32 %v299, %v404
    %v471 = vmax.f32 %v298, %v406
    %v472 = vmax.f32 %v300, %v408
    %v473 = vmax.f32 %v308, %v410
    %v474 = vmax.f32 %v316, %v412
    %v475 = vmax.f32 %v315, %v414
    %v476 = vmax.f32 %v317, %v416
    %v477 = vmax.f32 %v325, %v418
    %v478 = vmax.f32 %v333, %v420
    %v479 = vmax.f32 %v332, %v422
    %v480 = vmax.f32 %v334, %v424
    %v481 = vmax.f32 %v342, %v426
    %v482 = vmax.f32 %v350, %v428
    %v483 = vmax.f32 %v349, %v430
    %v484 = vmax.f32 %v351, %v432
    %v485 = vmax.f32 %v359, %v434
    %v486 = vmax.f32 %v367, %v436
    %v487 = vmax.f32 %v366, %v438
    %v488 = vmax.f32 %v368, %v440
    %v489 = vld [vmem:[%s2] sm:$0xff]
    %v490 = vld [vmem:[%s2 + $0x8] sm:$0xff]
    %v491 = vld [vmem:[%s2 + $0x10] sm:$0xff]
    %v492 = vld [vmem:[%s2 + $0x18] sm:$0xff]
    %v493 = vld [vmem:[%s2 + $0x20] sm:$0xff]
    %v494 = vld [vmem:[%s2 + $0x28] sm:$0xff]
    %v495 = vld [vmem:[%s2 + $0x30] sm:$0xff]
    %v496 = vld [vmem:[%s2 + $0x38] sm:$0xff]
    %v497 = vld [vmem:[%s2 + $0x40] sm:$0xff]
    %v498 = vld [vmem:[%s2 + $0x48] sm:$0xff]
    %v499 = vld [vmem:[%s2 + $0x50] sm:$0xff]
    %v500 = vld [vmem:[%s2 + $0x58] sm:$0xff]
    %v501 = vld [vmem:[%s2 + $0x60] sm:$0xff]
    %v502 = vld [vmem:[%s2 + $0x68] sm:$0xff]
    %v503 = vld [vmem:[%s2 + $0x70] sm:$0xff]
    %v522 = vlaneseq
    %v523 = vshrl.u32 %v522, 7
    %v524 = vsub.s32 0, %v523
    %v525 = vrot.slane %v465, %v524
    %v526 = vlaneseq
    %v527 = vshrl.u32 %v526, 7
    %v528 = vsub.s32 0, %v527
    %v529 = vrot.slane %v466, %v528
    %v530 = vlaneseq
    %v531 = vshrl.u32 %v530, 7
    %v532 = vsub.s32 0, %v531
    %v533 = vrot.slane %v467, %v532
    %v534 = vlaneseq
    %v535 = vshrl.u32 %v534, 7
    %v536 = vsub.s32 0, %v535
    %v537 = vrot.slane %v469, %v536
    %v538 = vlaneseq
    %v539 = vshrl.u32 %v538, 7
    %v540 = vsub.s32 0, %v539
    %v541 = vrot.slane %v470, %v540
    %v542 = vlaneseq
    %v543 = vshrl.u32 %v542, 7
    %v544 = vsub.s32 0, %v543
    %v545 = vrot.slane %v471, %v544
    %v546 = vlaneseq
    %v547 = vshrl.u32 %v546, 7
    %v548 = vsub.s32 0, %v547
    %v549 = vrot.slane %v473, %v548
    %v550 = vlaneseq
    %v551 = vshrl.u32 %v550, 7
    %v552 = vsub.s32 0, %v551
    %v553 = vrot.slane %v474, %v552
    %v554 = vlaneseq
    %v555 = vshrl.u32 %v554, 7
    %v556 = vsub.s32 0, %v555
    %v557 = vrot.slane %v475, %v556
    %v558 = vlaneseq
    %v559 = vshrl.u32 %v558, 7
    %v560 = vsub.s32 0, %v559
    %v561 = vrot.slane %v477, %v560
    %v562 = vlaneseq
    %v563 = vshrl.u32 %v562, 7
    %v564 = vsub.s32 0, %v563
    %v565 = vrot.slane %v478, %v564
    %v566 = vlaneseq
    %v567 = vshrl.u32 %v566, 7
    %v568 = vsub.s32 0, %v567
    %v569 = vrot.slane %v479, %v568
    %v570 = vlaneseq
    %v571 = vshrl.u32 %v570, 7
    %v572 = vsub.s32 0, %v571
    %v573 = vrot.slane %v481, %v572
    %v574 = vlaneseq
    %v575 = vshrl.u32 %v574, 7
    %v576 = vsub.s32 0, %v575
    %v577 = vrot.slane %v482, %v576
    %v578 = vlaneseq
    %v579 = vshrl.u32 %v578, 7
    %v580 = vsub.s32 0, %v579
    %v581 = vrot.slane %v483, %v580
    %v582 = vlaneseq
    %v583 = vshrl.u32 %v582, 7
    %v584 = vsub.s32 0, %v583
    %v585 = vrot.slane %v485, %v584
    %v586 = vlaneseq
    %v587 = vshrl.u32 %v586, 7
    %v588 = vsub.s32 0, %v587
    %v589 = vrot.slane %v486, %v588
    %v590 = vlaneseq
    %v591 = vshrl.u32 %v590, 7
    %v592 = vsub.s32 0, %v591
    %v593 = vrot.slane %v487, %v592
    %vm594 = vcmask 1042434
    %v595 = vsel %vm594, %v529, %v525
    %vm596 = vcmask 1043459
    %v597 = vsel %vm596, %v533, %v595
    %v598 = vsel %vm594, %v541, %v537
    %v599 = vsel %vm596, %v545, %v598
    %v600 = vsel %vm594, %v553, %v549
    %v601 = vsel %vm596, %v557, %v600
    %v602 = vsel %vm594, %v565, %v561
    %v603 = vsel %vm596, %v569, %v602
    %v604 = vsel %vm594, %v577, %v573
    %v605 = vsel %vm596, %v581, %v604
    %v606 = vsel %vm594, %v589, %v585
    %v607 = vsel %vm596, %v593, %v606
    %v614 = vsel %vm55, 0.0, %v597
    %v615 = vsel %vm55, 0.0, %v599
    %v616 = vsel %vm55, 0.0, %v601
    %v617 = vsel %vm55, 0.0, %v603
    %v618 = vsel %vm55, 0.0, %v605
    %v619 = vsel %vm55, 0.0, %v607
    %v626 = vlaneseq
    %v627 = vshrl.u32 %v626, 7
    %v628 = vsub.s32 0, %v627
    %v629 = vrot.slane %v468, %v628
    %v630 = vlaneseq
    %v631 = vshrl.u32 %v630, 7
    %v632 = vsub.s32 0, %v631
    %v633 = vrot.slane %v472, %v632
    %v634 = vlaneseq
    %v635 = vshrl.u32 %v634, 7
    %v636 = vsub.s32 0, %v635
    %v637 = vrot.slane %v476, %v636
    %v638 = vlaneseq
    %v639 = vshrl.u32 %v638, 7
    %v640 = vsub.s32 0, %v639
    %v641 = vrot.slane %v480, %v640
    %v642 = vlaneseq
    %v643 = vshrl.u32 %v642, 7
    %v644 = vsub.s32 0, %v643
    %v645 = vrot.slane %v484, %v644
    %v646 = vlaneseq
    %v647 = vshrl.u32 %v646, 7
    %v648 = vsub.s32 0, %v647
    %v649 = vrot.slane %v488, %v648
    %vm650 = vcmask 1041409
    %v651 = vsel %vm650, %v533, %v529
    %v652 = vsel %vm594, %v629, %v651
    %v653 = vsel %vm650, %v545, %v541
    %v654 = vsel %vm594, %v633, %v653
    %v655 = vsel %vm650, %v557, %v553
    %v656 = vsel %vm594, %v637, %v655
    %v657 = vsel %vm650, %v569, %v565
    %v658 = vsel %vm594, %v641, %v657
    %v659 = vsel %vm650, %v581, %v577
    %v660 = vsel %vm594, %v645, %v659
    %v661 = vsel %vm650, %v593, %v589
    %v662 = vsel %vm594, %v649, %v661
    %vm669 = vcmask 1042432
    %v670 = vsel %vm669, %v652, 0.0
    %v671 = vsel %vm669, %v654, 0.0
    %v672 = vsel %vm669, %v656, 0.0
    %v673 = vsel %vm669, %v658, 0.0
    %v674 = vsel %vm669, %v660, 0.0
    %v675 = vsel %vm669, %v662, 0.0
    %v676 = vsel %vm650, %v529, %v525
    %v677 = vsel %vm594, %v533, %v676
    %v678 = vsel %vm596, %v629, %v677
    %v679 = vsel %vm650, %v541, %v537
    %v680 = vsel %vm594, %v545, %v679
    %v681 = vsel %vm596, %v633, %v680
    %v682 = vsel %vm650, %v553, %v549
    %v683 = vsel %vm594, %v557, %v682
    %v684 = vsel %vm596, %v637, %v683
    %v685 = vsel %vm650, %v565, %v561
    %v686 = vsel %vm594, %v569, %v685
    %v687 = vsel %vm596, %v641, %v686
    %v688 = vsel %vm650, %v577, %v573
    %v689 = vsel %vm594, %v581, %v688
    %v690 = vsel %vm596, %v645, %v689
    %v691 = vsel %vm650, %v589, %v585
    %v692 = vsel %vm594, %v593, %v691
    %v693 = vsel %vm596, %v649, %v692
    %694 = vrot.lane.b32.xlu0 %v678, 40
    %v695 = vpop.permute.xlu0 %694
    %696 = vrot.lane.b32.xlu0 %v681, 40
    %v697 = vpop.permute.xlu0 %696
    %698 = vrot.lane.b32.xlu0 %v684, 40
    %v699 = vpop.permute.xlu0 %698
    %700 = vrot.lane.b32.xlu0 %v687, 40
    %v701 = vpop.permute.xlu0 %700
    %702 = vrot.lane.b32.xlu0 %v690, 40
    %v703 = vpop.permute.xlu0 %702
    %704 = vrot.lane.b32.xlu0 %v693, 40
    %v705 = vpop.permute.xlu0 %704
    %718 = vrot.lane.b32.xlu0 %v670, 80
    %v719 = vpop.permute.xlu0 %718
    %720 = vrot.lane.b32.xlu0 %v671, 80
    %v721 = vpop.permute.xlu0 %720
    %722 = vrot.lane.b32.xlu0 %v672, 80
    %v723 = vpop.permute.xlu0 %722
    %724 = vrot.lane.b32.xlu0 %v673, 80
    %v725 = vpop.permute.xlu0 %724
    %726 = vrot.lane.b32.xlu0 %v674, 80
    %v727 = vpop.permute.xlu0 %726
    %728 = vrot.lane.b32.xlu0 %v675, 80
    %v729 = vpop.permute.xlu0 %728
    %vm736 = vcmask 326656
    %v737 = vsel %vm736, %v614, %v695
    %v738 = vsel %vm736, %v615, %v697
    %v739 = vsel %vm736, %v616, %v699
    %v740 = vsel %vm736, %v617, %v701
    %v741 = vsel %vm736, %v618, %v703
    %v742 = vsel %vm736, %v619, %v705
    %vm743 = vcmask 654336
    %v744 = vsel %vm743, %v737, %v719
    %v745 = vsel %vm743, %v738, %v721
    %v746 = vsel %vm743, %v739, %v723
    %v747 = vsel %vm743, %v740, %v725
    %v748 = vsel %vm743, %v741, %v727
    %v749 = vsel %vm743, %v742, %v729
    %v756 = vcombine.low %v744, %v745
    %v757 = vcombine.low %v746, %v747
    %v758 = vcombine.low %v748, %v749
    %vm759 = vcmask 982016
    %v760 = vsel %vm759, %v756, 0
    %v762 = vsel %vm759, %v757, 0
    %v764 = vsel %vm759, %v758, 0
    %766 = vmatprep.subr.mxu0 0.0
    %767 = vmatpush1.msra.mxu0 %v489
    %768 = vmatprep.subr.mxu0 0.0
    %769 = vmatpush1.msra.mxu0 %v490
    %770 = vmatprep.subr.mxu0 0.0
    %771 = vmatpush1.msra.mxu0 %v491
    %772 = vmatprep.subr.mxu0 0.0
    %773 = vmatpush1.msra.mxu0 %v492
    %774 = vmatprep.subr.mxu0 0.0
    %775 = vmatpush1.msra.mxu0 %v493
    %776 = vmatprep.subr.mxu0 0.0
    %777 = vmatpush1.msra.mxu0 %v494
    %778 = vmatprep.subr.mxu0 0.0
    %779 = vmatpush1.msra.mxu0 %v495
    %780 = vmatprep.subr.mxu0 0.0
    %781 = vmatpush1.msra.mxu0 %v496
    %782 = vmatprep.subr.mxu0 0.0
    %783 = vmatpush1.msra.mxu0 %v497
    %784 = vmatprep.subr.mxu0 0.0
    %785 = vmatpush1.msra.mxu0 %v498
    %786 = vmatprep.subr.mxu0 0.0
    %787 = vmatpush1.msra.mxu0 %v499
    %788 = vmatprep.subr.mxu0 0.0
    %789 = vmatpush1.msra.mxu0 %v500
    %790 = vmatprep.subr.mxu0 0.0
    %791 = vmatpush1.msra.mxu0 %v501
    %792 = vmatprep.subr.mxu0 0.0
    %793 = vmatpush1.msra.mxu0 %v502
    %794 = vmatprep.subr.mxu0 0.0
    %795 = vmatpush1.msra.mxu0 %v503
    %796 = vmatprep.subr.mxu0 0.0
    %797 = vmatpush1.msra.mxu0 0.0
    %798 = vmatprep.subr.mxu0 0.0
    %799 = vmatpush1.msra.mxu0 0.0
    %800 = vmatprep.subr.mxu0 0.0
    %801 = vmatpush1.msra.mxu0 0.0
    %802 = vmatprep.subr.mxu0 0.0
    %803 = vmatpush1.msra.mxu0 0.0
    %804 = vmatprep.subr.mxu0 0.0
    %805 = vmatpush1.msra.mxu0 0.0
    %806 = vmatprep.subr.mxu0 0.0
    %807 = vmatpush1.msra.mxu0 0.0
    %808 = vmatprep.subr.mxu0 0.0
    %809 = vmatpush1.msra.mxu0 0.0
    %810 = vmatprep.subr.mxu0 0.0
    %811 = vmatpush1.msra.mxu0 0.0
    %812 = vmatprep.subr.mxu0 0.0
    %813 = vmatpush1.msra.mxu0 0.0
    %814 = vmatprep.subr.mxu0 0.0
    %815 = vmatpush1.msra.mxu0 0.0
    %816 = vmatprep.subr.mxu0 0.0
    %817 = vmatpush1.msra.mxu0 0.0
    %818 = vmatprep.subr.mxu0 0.0
    %819 = vmatpush1.msra.mxu0 0.0
    %820 = vmatprep.subr.mxu0 0.0
    %821 = vmatpush1.msra.mxu0 0.0
    %822 = vmatprep.subr.mxu0 0.0
    %823 = vmatpush1.msra.mxu0 0.0
    %824 = vmatprep.subr.mxu0 0.0
    %825 = vmatpush1.msra.mxu0 0.0
    %826 = vmatprep.subr.mxu0 0.0
    %827 = vmatpush1.msra.mxu0 0.0
    %828 = vmatprep.subr.mxu0 0.0
    %829 = vmatpush1.msra.mxu0 0.0
    %830 = vmatprep.mubr.f32.mxu0 0.0
    %831 = vmatmul.mubr.f32.gmra.mrb[0].mxu0 %v760
    %v832 = vpop.f32.mrb[0].mxu0
    %v833 = vadd.f32 0.0, %v832
    %v834 = vpop.f32.mrb[0].mxu0
    %835 = vmatprep.mubr.f32.mxu0 0.0
    %836 = vmatmul.mubr.f32.gmra.mrb[0].mxu0 %v762
    %v837 = vpop.f32.mrb[0].mxu0
    %v838 = vadd.f32 0.0, %v837
    %v839 = vpop.f32.mrb[0].mxu0
    %840 = vmatprep.mubr.f32.mxu0 0.0
    %841 = vmatmul.mubr.f32.gmra.mrb[0].mxu0 %v764
    %v842 = vpop.f32.mrb[0].mxu0
    %v843 = vadd.f32 0.0, %v842
    %v844 = vpop.f32.mrb[0].mxu0
    %845 = vdwg.mxu0
    %v849 = vcombine.high %v833, %v833
    %v851 = vunpack.c.l.s4 1983009808
    %v852 = vunpack.c.0.s8 %v851
    %v853 = vlaneseq
    %v854 = vshrl.u32 %v853, 7
    %v855 = vsub.s32 %v852, %v854
    %v856 = vrot.slane %v833, %v855
    %v858 = vunpack.c.l.s4 1983009808
    %v859 = vunpack.c.0.s8 %v858
    %v860 = vlaneseq
    %v861 = vshrl.u32 %v860, 7
    %v862 = vsub.s32 %v859, %v861
    %v863 = vrot.slane %v849, %v862
    %v864 = vcombine.high %v856, %v856
    %v865 = vcombine.high %v863, %v863
    %v866 = vcombine.high %v838, %v838
    %v868 = vunpack.c.l.s4 1983009808
    %v869 = vunpack.c.0.s8 %v868
    %v870 = vlaneseq
    %v871 = vshrl.u32 %v870, 7
    %v872 = vsub.s32 %v869, %v871
    %v873 = vrot.slane %v838, %v872
    %v875 = vunpack.c.l.s4 1983009808
    %v876 = vunpack.c.0.s8 %v875
    %v877 = vlaneseq
    %v878 = vshrl.u32 %v877, 7
    %v879 = vsub.s32 %v876, %v878
    %v880 = vrot.slane %v866, %v879
    %v881 = vcombine.high %v873, %v873
    %v882 = vcombine.high %v880, %v880
    %v883 = vcombine.high %v843, %v843
    %v885 = vunpack.c.l.s4 1983009808
    %v886 = vunpack.c.0.s8 %v885
    %v887 = vlaneseq
    %v888 = vshrl.u32 %v887, 7
    %v889 = vsub.s32 %v886, %v888
    %v890 = vrot.slane %v843, %v889
    %v892 = vunpack.c.l.s4 1983009808
    %v893 = vunpack.c.0.s8 %v892
    %v894 = vlaneseq
    %v895 = vshrl.u32 %v894, 7
    %v896 = vsub.s32 %v893, %v895
    %v897 = vrot.slane %v883, %v896
    %v898 = vcombine.high %v890, %v890
    %v899 = vcombine.high %v897, %v897
    %v912 = vrot.slane %v856, 7
    %v913 = vrot.slane %v912, 2
    %v914 = vrot.slane %v864, 7
    %v915 = vrot.slane %v914, 2
    %v916 = vrot.slane %v863, 7
    %v917 = vrot.slane %v916, 2
    %v918 = vrot.slane %v865, 7
    %v919 = vrot.slane %v918, 2
    %v920 = vrot.slane %v873, 7
    %v921 = vrot.slane %v920, 2
    %v922 = vrot.slane %v881, 7
    %v923 = vrot.slane %v922, 2
    %v924 = vrot.slane %v880, 7
    %v925 = vrot.slane %v924, 2
    %v926 = vrot.slane %v882, 7
    %v927 = vrot.slane %v926, 2
    %v928 = vrot.slane %v890, 7
    %v929 = vrot.slane %v928, 2
    %v930 = vrot.slane %v898, 7
    %v931 = vrot.slane %v930, 2
    %v932 = vrot.slane %v897, 7
    %v933 = vrot.slane %v932, 2
    %v934 = vrot.slane %v899, 7
    %v935 = vrot.slane %v934, 2
    %v948 = vmax.f32 %v856, %v913
    %v949 = vmax.f32 %v864, %v915
    %v950 = vmax.f32 %v863, %v917
    %v951 = vmax.f32 %v865, %v919
    %v952 = vmax.f32 %v873, %v921
    %v953 = vmax.f32 %v881, %v923
    %v954 = vmax.f32 %v880, %v925
    %v955 = vmax.f32 %v882, %v927
    %v956 = vmax.f32 %v890, %v929
    %v957 = vmax.f32 %v898, %v931
    %v958 = vmax.f32 %v897, %v933
    %v959 = vmax.f32 %v899, %v935
    %v960 = vld [vmem:[%s3] sm:$0xff]
    %v961 = vld [vmem:[%s3 + $0x8] sm:$0xff]
    %v962 = vld [vmem:[%s3 + $0x10] sm:$0xff]
    %v963 = vld [vmem:[%s3 + $0x18] sm:$0xff]
    %v964 = vld [vmem:[%s3 + $0x20] sm:$0xff]
    %v965 = vld [vmem:[%s3 + $0x28] sm:$0xff]
    %v966 = vld [vmem:[%s3 + $0x30] sm:$0xff]
    %v967 = vld [vmem:[%s3 + $0x38] sm:$0xff]
    %v968 = vld [vmem:[%s3 + $0x40] sm:$0xff]
    %v969 = vld [vmem:[%s3 + $0x48] sm:$0xff]
    %v970 = vld [vmem:[%s3 + $0x50] sm:$0xff]
    %v971 = vld [vmem:[%s3 + $0x58] sm:$0xff]
    %v972 = vld [vmem:[%s3 + $0x60] sm:$0xff]
    %v973 = vld [vmem:[%s3 + $0x68] sm:$0xff]
    %v974 = vld [vmem:[%s3 + $0x70] sm:$0xff]
    %v981 = vlaneseq
    %v982 = vshrl.u32 %v981, 7
    %v983 = vsub.s32 0, %v982
    %v984 = vrot.slane %v948, %v983
    %v985 = vlaneseq
    %v986 = vshrl.u32 %v985, 7
    %v987 = vsub.s32 0, %v986
    %v988 = vrot.slane %v950, %v987
    %v989 = vlaneseq
    %v990 = vshrl.u32 %v989, 7
    %v991 = vsub.s32 0, %v990
    %v992 = vrot.slane %v952, %v991
    %v993 = vlaneseq
    %v994 = vshrl.u32 %v993, 7
    %v995 = vsub.s32 0, %v994
    %v996 = vrot.slane %v954, %v995
    %v997 = vlaneseq
    %v998 = vshrl.u32 %v997, 7
    %v999 = vsub.s32 0, %v998
    %v1000 = vrot.slane %v956, %v999
    %v1001 = vlaneseq
    %v1002 = vshrl.u32 %v1001, 7
    %v1003 = vsub.s32 0, %v1002
    %v1004 = vrot.slane %v958, %v1003
    %v1011 = vsel %vm55, 0.0, %v984
    %v1012 = vsel %vm55, 0.0, %v988
    %v1013 = vsel %vm55, 0.0, %v992
    %v1014 = vsel %vm55, 0.0, %v996
    %v1015 = vsel %vm55, 0.0, %v1000
    %v1016 = vsel %vm55, 0.0, %v1004
    %v1017 = vsel %vm55, %v949, 0.0
    %v1018 = vsel %vm55, %v951, 0.0
    %v1019 = vsel %vm55, %v953, 0.0
    %v1020 = vsel %vm55, %v955, 0.0
    %v1021 = vsel %vm55, %v957, 0.0
    %v1022 = vsel %vm55, %v959, 0.0
    %v1029 = vlaneseq
    %v1030 = vshrl.u32 %v1029, 7
    %v1031 = vsub.s32 0, %v1030
    %v1032 = vrot.slane %v949, %v1031
    %v1033 = vlaneseq
    %v1034 = vshrl.u32 %v1033, 7
    %v1035 = vsub.s32 0, %v1034
    %v1036 = vrot.slane %v951, %v1035
    %v1037 = vlaneseq
    %v1038 = vshrl.u32 %v1037, 7
    %v1039 = vsub.s32 0, %v1038
    %v1040 = vrot.slane %v953, %v1039
    %v1041 = vlaneseq
    %v1042 = vshrl.u32 %v1041, 7
    %v1043 = vsub.s32 0, %v1042
    %v1044 = vrot.slane %v955, %v1043
    %v1045 = vlaneseq
    %v1046 = vshrl.u32 %v1045, 7
    %v1047 = vsub.s32 0, %v1046
    %v1048 = vrot.slane %v957, %v1047
    %v1049 = vlaneseq
    %v1050 = vshrl.u32 %v1049, 7
    %v1051 = vsub.s32 0, %v1050
    %v1052 = vrot.slane %v959, %v1051
    %v1053 = vsel %vm650, %v1032, %v984
    %v1054 = vsel %vm650, %v1036, %v988
    %v1055 = vsel %vm650, %v1040, %v992
    %v1056 = vsel %vm650, %v1044, %v996
    %v1057 = vsel %vm650, %v1048, %v1000
    %v1058 = vsel %vm650, %v1052, %v1004
    %1059 = vrot.lane.b32.xlu0 %v1053, 40
    %v1060 = vpop.permute.xlu0 %1059
    %1061 = vrot.lane.b32.xlu0 %v1054, 40
    %v1062 = vpop.permute.xlu0 %1061
    %1063 = vrot.lane.b32.xlu0 %v1055, 40
    %v1064 = vpop.permute.xlu0 %1063
    %1065 = vrot.lane.b32.xlu0 %v1056, 40
    %v1066 = vpop.permute.xlu0 %1065
    %1067 = vrot.lane.b32.xlu0 %v1057, 40
    %v1068 = vpop.permute.xlu0 %1067
    %1069 = vrot.lane.b32.xlu0 %v1058, 40
    %v1070 = vpop.permute.xlu0 %1069
    %1083 = vrot.lane.b32.xlu0 %v1017, 80
    %v1084 = vpop.permute.xlu0 %1083
    %1085 = vrot.lane.b32.xlu0 %v1018, 80
    %v1086 = vpop.permute.xlu0 %1085
    %1087 = vrot.lane.b32.xlu0 %v1019, 80
    %v1088 = vpop.permute.xlu0 %1087
    %1089 = vrot.lane.b32.xlu0 %v1020, 80
    %v1090 = vpop.permute.xlu0 %1089
    %1091 = vrot.lane.b32.xlu0 %v1021, 80
    %v1092 = vpop.permute.xlu0 %1091
    %1093 = vrot.lane.b32.xlu0 %v1022, 80
    %v1094 = vpop.permute.xlu0 %1093
    %v1101 = vsel %vm736, %v1011, %v1060
    %v1102 = vsel %vm736, %v1012, %v1062
    %v1103 = vsel %vm736, %v1013, %v1064
    %v1104 = vsel %vm736, %v1014, %v1066
    %v1105 = vsel %vm736, %v1015, %v1068
    %v1106 = vsel %vm736, %v1016, %v1070
    %v1107 = vsel %vm743, %v1101, %v1084
    %v1108 = vsel %vm743, %v1102, %v1086
    %v1109 = vsel %vm743, %v1103, %v1088
    %v1110 = vsel %vm743, %v1104, %v1090
    %v1111 = vsel %vm743, %v1105, %v1092
    %v1112 = vsel %vm743, %v1106, %v1094
    %v1119 = vcombine.low %v1107, %v1108
    %v1120 = vcombine.low %v1109, %v1110
    %v1122 = vunpack.c.l.s4 1983009808
    %v1123 = vunpack.c.0.s8 %v1122
    %v1124 = vlaneseq
    %v1125 = vshrl.u32 %v1124, 7
    %v1126 = vsub.s32 %v1123, %v1125
    %v1127 = vrot.slane %v1119, %v1126
    %v1129 = vunpack.c.l.s4 1983009808
    %v1130 = vunpack.c.0.s8 %v1129
    %v1131 = vlaneseq
    %v1132 = vshrl.u32 %v1131, 7
    %v1133 = vsub.s32 %v1130, %v1132
    %v1134 = vrot.slane %v1120, %v1133
    %v1135 = vcombine.low %v1127, %v1134
    %v1136 = vcombine.low %v1111, %v1112
    %v1138 = vunpack.c.l.s4 1983009808
    %v1139 = vunpack.c.0.s8 %v1138
    %v1140 = vlaneseq
    %v1141 = vshrl.u32 %v1140, 7
    %v1142 = vsub.s32 %v1139, %v1141
    %v1143 = vrot.slane %v1136, %v1142
    %v1144 = vsel %vm759, %v1135, 0
    %v1146 = vsel %vm759, %v1143, 0
    %1148 = vmatprep.subr.mxu0 0.0
    %1149 = vmatpush1.msra.mxu0 %v960
    %1150 = vmatprep.subr.mxu0 0.0
    %1151 = vmatpush1.msra.mxu0 %v961
    %1152 = vmatprep.subr.mxu0 0.0
    %1153 = vmatpush1.msra.mxu0 %v962
    %1154 = vmatprep.subr.mxu0 0.0
    %1155 = vmatpush1.msra.mxu0 %v963
    %1156 = vmatprep.subr.mxu0 0.0
    %1157 = vmatpush1.msra.mxu0 %v964
    %1158 = vmatprep.subr.mxu0 0.0
    %1159 = vmatpush1.msra.mxu0 %v965
    %1160 = vmatprep.subr.mxu0 0.0
    %1161 = vmatpush1.msra.mxu0 %v966
    %1162 = vmatprep.subr.mxu0 0.0
    %1163 = vmatpush1.msra.mxu0 %v967
    %1164 = vmatprep.subr.mxu0 0.0
    %1165 = vmatpush1.msra.mxu0 %v968
    %1166 = vmatprep.subr.mxu0 0.0
    %1167 = vmatpush1.msra.mxu0 %v969
    %1168 = vmatprep.subr.mxu0 0.0
    %1169 = vmatpush1.msra.mxu0 %v970
    %1170 = vmatprep.subr.mxu0 0.0
    %1171 = vmatpush1.msra.mxu0 %v971
    %1172 = vmatprep.subr.mxu0 0.0
    %1173 = vmatpush1.msra.mxu0 %v972
    %1174 = vmatprep.subr.mxu0 0.0
    %1175 = vmatpush1.msra.mxu0 %v973
    %1176 = vmatprep.subr.mxu0 0.0
    %1177 = vmatpush1.msra.mxu0 %v974
    %1178 = vmatprep.subr.mxu0 0.0
    %1179 = vmatpush1.msra.mxu0 0.0
    %1180 = vmatprep.subr.mxu0 0.0
    %1181 = vmatpush1.msra.mxu0 0.0
    %1182 = vmatprep.subr.mxu0 0.0
    %1183 = vmatpush1.msra.mxu0 0.0
    %1184 = vmatprep.subr.mxu0 0.0
    %1185 = vmatpush1.msra.mxu0 0.0
    %1186 = vmatprep.subr.mxu0 0.0
    %1187 = vmatpush1.msra.mxu0 0.0
    %1188 = vmatprep.subr.mxu0 0.0
    %1189 = vmatpush1.msra.mxu0 0.0
    %1190 = vmatprep.subr.mxu0 0.0
    %1191 = vmatpush1.msra.mxu0 0.0
    %1192 = vmatprep.subr.mxu0 0.0
    %1193 = vmatpush1.msra.mxu0 0.0
    %1194 = vmatprep.subr.mxu0 0.0
    %1195 = vmatpush1.msra.mxu0 0.0
    %1196 = vmatprep.subr.mxu0 0.0
    %1197 = vmatpush1.msra.mxu0 0.0
    %1198 = vmatprep.subr.mxu0 0.0
    %1199 = vmatpush1.msra.mxu0 0.0
    %1200 = vmatprep.subr.mxu0 0.0
    %1201 = vmatpush1.msra.mxu0 0.0
    %1202 = vmatprep.subr.mxu0 0.0
    %1203 = vmatpush1.msra.mxu0 0.0
    %1204 = vmatprep.subr.mxu0 0.0
    %1205 = vmatpush1.msra.mxu0 0.0
    %1206 = vmatprep.subr.mxu0 0.0
    %1207 = vmatpush1.msra.mxu0 0.0
    %1208 = vmatprep.subr.mxu0 0.0
    %1209 = vmatpush1.msra.mxu0 0.0
    %1210 = vmatprep.subr.mxu0 0.0
    %1211 = vmatpush1.msra.mxu0 0.0
    %1212 = vmatprep.mubr.f32.mxu0 0.0
    %1213 = vmatmul.mubr.f32.gmra.mrb[0].mxu0 %v1144
    %v1214 = vpop.f32.mrb[0].mxu0
    %v1215 = vadd.f32 0.0, %v1214
    %v1216 = vpop.f32.mrb[0].mxu0
    %1217 = vmatprep.mubr.f32.mxu0 0.0
    %1218 = vmatmul.mubr.f32.gmra.mrb[0].mxu0 %v1146
    %v1219 = vpop.f32.mrb[0].mxu0
    %v1220 = vadd.f32 0.0, %v1219
    %v1221 = vpop.f32.mrb[0].mxu0
    %1222 = vdwg.mxu0
    %v1225 = vcombine.high %v1215, %v1215
    %v1227 = vunpack.c.l.s4 1983009808
    %v1228 = vunpack.c.0.s8 %v1227
    %v1229 = vlaneseq
    %v1230 = vshrl.u32 %v1229, 7
    %v1231 = vsub.s32 %v1228, %v1230
    %v1232 = vrot.slane %v1215, %v1231
    %v1234 = vunpack.c.l.s4 1983009808
    %v1235 = vunpack.c.0.s8 %v1234
    %v1236 = vlaneseq
    %v1237 = vshrl.u32 %v1236, 7
    %v1238 = vsub.s32 %v1235, %v1237
    %v1239 = vrot.slane %v1225, %v1238
    %v1240 = vcombine.high %v1232, %v1232
    %v1241 = vcombine.high %v1239, %v1239
    %v1243 = vunpack.c.l.s4 1983009808
    %v1244 = vunpack.c.0.s8 %v1243
    %v1245 = vlaneseq
    %v1246 = vshrl.u32 %v1245, 7
    %v1247 = vsub.s32 %v1244, %v1246
    %v1248 = vrot.slane %v1220, %v1247
    %v1249 = vcombine.high %v1248, %v1248
    %v1256 = vrot.slane %v1232, 7
    %v1257 = vrot.slane %v1256, 2
    %v1258 = vrot.slane %v1240, 7
    %v1259 = vrot.slane %v1258, 2
    %v1260 = vrot.slane %v1239, 7
    %v1261 = vrot.slane %v1260, 2
    %v1262 = vrot.slane %v1241, 7
    %v1263 = vrot.slane %v1262, 2
    %v1264 = vrot.slane %v1248, 7
    %v1265 = vrot.slane %v1264, 2
    %v1266 = vrot.slane %v1249, 7
    %v1267 = vrot.slane %v1266, 2
    %v1274 = vmax.f32 %v1232, %v1257
    %v1275 = vmax.f32 %v1240, %v1259
    %v1276 = vmax.f32 %v1239, %v1261
    %v1277 = vmax.f32 %v1241, %v1263
    %v1278 = vmax.f32 %v1248, %v1265
    %v1279 = vmax.f32 %v1249, %v1267
    %v1280 = vld [vmem:[%s4] sm:$0xff]
    %v1281 = vld [vmem:[%s4 + $0x8] sm:$0xff]
    %v1282 = vld [vmem:[%s4 + $0x10] sm:$0xff]
    %v1283 = vld [vmem:[%s4 + $0x18] sm:$0xff]
    %v1284 = vld [vmem:[%s4 + $0x20] sm:$0xff]
    %v1285 = vld [vmem:[%s5] sm:$0x1]
    %v1287 = vlaneseq
    %v1288 = vshrl.u32 %v1287, 7
    %v1289 = vsub.s32 0, %v1288
    %v1290 = vrot.slane %v1285, %v1289
    %v1298 = vlaneseq
    %v1299 = vshrl.u32 %v1298, 7
    %v1300 = vsub.s32 0, %v1299
    %v1301 = vrot.slane %v1274, %v1300
    %v1302 = vlaneseq
    %v1303 = vshrl.u32 %v1302, 7
    %v1304 = vsub.s32 0, %v1303
    %v1305 = vrot.slane %v1275, %v1304
    %v1306 = vlaneseq
    %v1307 = vshrl.u32 %v1306, 7
    %v1308 = vsub.s32 0, %v1307
    %v1309 = vrot.slane %v1276, %v1308
    %v1310 = vlaneseq
    %v1311 = vshrl.u32 %v1310, 7
    %v1312 = vsub.s32 0, %v1311
    %v1313 = vrot.slane %v1277, %v1312
    %v1314 = vlaneseq
    %v1315 = vshrl.u32 %v1314, 7
    %v1316 = vsub.s32 0, %v1315
    %v1317 = vrot.slane %v1278, %v1316
    %v1318 = vlaneseq
    %v1319 = vshrl.u32 %v1318, 7
    %v1320 = vsub.s32 0, %v1319
    %v1321 = vrot.slane %v1279, %v1320
    %v1322 = vsel %vm650, %v1305, %v1301
    %v1323 = vsel %vm594, %v1309, %v1322
    %v1324 = vsel %vm596, %v1313, %v1323
    %vm1325 = vcmask 1044484
    %v1326 = vsel %vm1325, %v1317, %v1324
    %vm1327 = vcmask 1045509
    %v1328 = vsel %vm1327, %v1321, %v1326
    %v1329 = vsel %vm736, %v1328, 0
    %1331 = vmatprep.subr.mxu0 0.0
    %1332 = vmatpush1.msra.mxu0 %v1280
    %1333 = vmatprep.subr.mxu0 0.0
    %1334 = vmatpush1.msra.mxu0 %v1281
    %1335 = vmatprep.subr.mxu0 0.0
    %1336 = vmatpush1.msra.mxu0 %v1282
    %1337 = vmatprep.subr.mxu0 0.0
    %1338 = vmatpush1.msra.mxu0 %v1283
    %1339 = vmatprep.subr.mxu0 0.0
    %1340 = vmatpush1.msra.mxu0 %v1284
    %1341 = vmatprep.subr.mxu0 0.0
    %1342 = vmatpush1.msra.mxu0 0.0
    %1343 = vmatprep.subr.mxu0 0.0
    %1344 = vmatpush1.msra.mxu0 0.0
    %1345 = vmatprep.subr.mxu0 0.0
    %1346 = vmatpush1.msra.mxu0 0.0
    %1347 = vmatprep.subr.mxu0 0.0
    %1348 = vmatpush1.msra.mxu0 0.0
    %1349 = vmatprep.subr.mxu0 0.0
    %1350 = vmatpush1.msra.mxu0 0.0
    %1351 = vmatprep.subr.mxu0 0.0
    %1352 = vmatpush1.msra.mxu0 0.0
    %1353 = vmatprep.subr.mxu0 0.0
    %1354 = vmatpush1.msra.mxu0 0.0
    %1355 = vmatprep.subr.mxu0 0.0
    %1356 = vmatpush1.msra.mxu0 0.0
    %1357 = vmatprep.subr.mxu0 0.0
    %1358 = vmatpush1.msra.mxu0 0.0
    %1359 = vmatprep.subr.mxu0 0.0
    %1360 = vmatpush1.msra.mxu0 0.0
    %1361 = vmatprep.subr.mxu0 0.0
    %1362 = vmatpush1.msra.mxu0 0.0
    %1363 = vmatprep.subr.mxu0 0.0
    %1364 = vmatpush1.msra.mxu0 0.0
    %1365 = vmatprep.subr.mxu0 0.0
    %1366 = vmatpush1.msra.mxu0 0.0
    %1367 = vmatprep.subr.mxu0 0.0
    %1368 = vmatpush1.msra.mxu0 0.0
    %1369 = vmatprep.subr.mxu0 0.0
    %1370 = vmatpush1.msra.mxu0 0.0
    %1371 = vmatprep.subr.mxu0 0.0
    %1372 = vmatpush1.msra.mxu0 0.0
    %1373 = vmatprep.subr.mxu0 0.0
    %1374 = vmatpush1.msra.mxu0 0.0
    %1375 = vmatprep.subr.mxu0 0.0
    %1376 = vmatpush1.msra.mxu0 0.0
    %1377 = vmatprep.subr.mxu0 0.0
    %1378 = vmatpush1.msra.mxu0 0.0
    %1379 = vmatprep.subr.mxu0 0.0
    %1380 = vmatpush1.msra.mxu0 0.0
    %1381 = vmatprep.subr.mxu0 0.0
    %1382 = vmatpush1.msra.mxu0 0.0
    %1383 = vmatprep.subr.mxu0 0.0
    %1384 = vmatpush1.msra.mxu0 0.0
    %1385 = vmatprep.subr.mxu0 0.0
    %1386 = vmatpush1.msra.mxu0 0.0
    %1387 = vmatprep.subr.mxu0 0.0
    %1388 = vmatpush1.msra.mxu0 0.0
    %1389 = vmatprep.subr.mxu0 0.0
    %1390 = vmatpush1.msra.mxu0 0.0
    %1391 = vmatprep.subr.mxu0 0.0
    %1392 = vmatpush1.msra.mxu0 0.0
    %1393 = vmatprep.subr.mxu0 0.0
    %1394 = vmatpush1.msra.mxu0 0.0
    %1395 = vmatprep.mubr.f32.mxu0 0.0
    %1396 = vmatmul.mubr.f32.gmra.mrb[0].mxu0 %v1329
    %v1397 = vpop.f32.mrb[0].mxu0
    %v1398 = vadd.f32 %v1290, %v1397
    %v1399 = vpop.f32.mrb[0].mxu0
    %1400 = vdwg.mxu0
    %v1401 = vmax.f32 %v1398, 0.0
    %v1402 = vld [vmem:[%s6] sm:$0xff]
    %v1403 = vld [vmem:[%s6 + $0x8] sm:$0xff]
    %v1404 = vld [vmem:[%s6 + $0x10] sm:$0xff]
    %v1405 = vld [vmem:[%s6 + $0x18] sm:$0xff]
    %v1406 = vld [vmem:[%s6 + $0x20] sm:$0xff]
    %v1407 = vld [vmem:[%s7] sm:$0x1]
    %v1409 = vlaneseq
    %v1410 = vshrl.u32 %v1409, 7
    %v1411 = vsub.s32 0, %v1410
    %v1412 = vrot.slane %v1407, %v1411
    %v1415 = vsel %vm736, %v1401, 0
    %1417 = vmatprep.subr.mxu0 0.0
    %1418 = vmatpush1.msra.mxu0 %v1402
    %1419 = vmatprep.subr.mxu0 0.0
    %1420 = vmatpush1.msra.mxu0 %v1403
    %1421 = vmatprep.subr.mxu0 0.0
    %1422 = vmatpush1.msra.mxu0 %v1404
    %1423 = vmatprep.subr.mxu0 0.0
    %1424 = vmatpush1.msra.mxu0 %v1405
    %1425 = vmatprep.subr.mxu0 0.0
    %1426 = vmatpush1.msra.mxu0 %v1406
    %1427 = vmatprep.subr.mxu0 0.0
    %1428 = vmatpush1.msra.mxu0 0.0
    %1429 = vmatprep.subr.mxu0 0.0
    %1430 = vmatpush1.msra.mxu0 0.0
    %1431 = vmatprep.subr.mxu0 0.0
    %1432 = vmatpush1.msra.mxu0 0.0
    %1433 = vmatprep.subr.mxu0 0.0
    %1434 = vmatpush1.msra.mxu0 0.0
    %1435 = vmatprep.subr.mxu0 0.0
    %1436 = vmatpush1.msra.mxu0 0.0
    %1437 = vmatprep.subr.mxu0 0.0
    %1438 = vmatpush1.msra.mxu0 0.0
    %1439 = vmatprep.subr.mxu0 0.0
    %1440 = vmatpush1.msra.mxu0 0.0
    %1441 = vmatprep.subr.mxu0 0.0
    %1442 = vmatpush1.msra.mxu0 0.0
    %1443 = vmatprep.subr.mxu0 0.0
    %1444 = vmatpush1.msra.mxu0 0.0
    %1445 = vmatprep.subr.mxu0 0.0
    %1446 = vmatpush1.msra.mxu0 0.0
    %1447 = vmatprep.subr.mxu0 0.0
    %1448 = vmatpush1.msra.mxu0 0.0
    %1449 = vmatprep.subr.mxu0 0.0
    %1450 = vmatpush1.msra.mxu0 0.0
    %1451 = vmatprep.subr.mxu0 0.0
    %1452 = vmatpush1.msra.mxu0 0.0
    %1453 = vmatprep.subr.mxu0 0.0
    %1454 = vmatpush1.msra.mxu0 0.0
    %1455 = vmatprep.subr.mxu0 0.0
    %1456 = vmatpush1.msra.mxu0 0.0
    %1457 = vmatprep.subr.mxu0 0.0
    %1458 = vmatpush1.msra.mxu0 0.0
    %1459 = vmatprep.subr.mxu0 0.0
    %1460 = vmatpush1.msra.mxu0 0.0
    %1461 = vmatprep.subr.mxu0 0.0
    %1462 = vmatpush1.msra.mxu0 0.0
    %1463 = vmatprep.subr.mxu0 0.0
    %1464 = vmatpush1.msra.mxu0 0.0
    %1465 = vmatprep.subr.mxu0 0.0
    %1466 = vmatpush1.msra.mxu0 0.0
    %1467 = vmatprep.subr.mxu0 0.0
    %1468 = vmatpush1.msra.mxu0 0.0
    %1469 = vmatprep.subr.mxu0 0.0
    %1470 = vmatpush1.msra.mxu0 0.0
    %1471 = vmatprep.subr.mxu0 0.0
    %1472 = vmatpush1.msra.mxu0 0.0
    %1473 = vmatprep.subr.mxu0 0.0
    %1474 = vmatpush1.msra.mxu0 0.0
    %1475 = vmatprep.subr.mxu0 0.0
    %1476 = vmatpush1.msra.mxu0 0.0
    %1477 = vmatprep.subr.mxu0 0.0
    %1478 = vmatpush1.msra.mxu0 0.0
    %1479 = vmatprep.subr.mxu0 0.0
    %1480 = vmatpush1.msra.mxu0 0.0
    %1481 = vmatprep.mubr.f32.mxu0 0.0
    %1482 = vmatmul.mubr.f32.gmra.mrb[0].mxu0 %v1415
    %v1483 = vpop.f32.mrb[0].mxu0
    %v1484 = vadd.f32 %v1412, %v1483
    %v1485 = vpop.f32.mrb[0].mxu0
    %1486 = vdwg.mxu0
    %1487 = vst [vmem:[#allocation2] sm:$0x3f] %v1484
    // Predicated region
    $region34: #{tpu_custom_call.1} parent=1 // pred_check
      _
    $region35: #{tpu_custom_call.1} parent=1 // pred_check_branch
      %1489 = sbr.rel (0) target = $region37
    $region36: #{tpu_custom_call.1} parent=1 // pred_region
      %s1491 = ssub.s32 128, 128
      %1492 = vsyncadd [#allocation3], %s1491
      %s1494 = sshll.u32 [#allocation2], 4
      %s1495 = int_to_ptr.vmem [resolvable:$true] %s1494
      %1497 = dma.vmem_to_hbm [thread:$0]  %s1495, 128, %s8, [#allocation3]
    $region37: #{tpu_custom_call.1} parent=1 // pred_fallthru
      _
    // Predicated region
    $region38: #{tpu_custom_call.1} parent=1 // pred_check
      _
    $region39: #{tpu_custom_call.1} parent=1 // pred_check_branch
      %1499 = sbr.rel (0) target = $region41
    $region40: #{tpu_custom_call.1} parent=1 // pred_region
      %1500 = dma.done [#allocation3], 128
    $region41: #{tpu_custom_call.1} parent=1 // pred_fallthru
      _
    %1501 = vsyncpa [#allocation3], 1

</llo_original>
